<compile_context>
chip_gen: v5e
topology: v5e:2x2
jax: 0.10.0
libtpu: 0.0.40
codegen_flags: <defaults>
</compile_context>

<pallas_src>
import math

import jax
import jax.numpy as jnp
from jax.experimental import pallas as pl
from jax.experimental.pallas import tpu as pltpu

LN_EPS = 1e-5  # PyTorch nn.LayerNorm default eps


def resnet_block_kernel(x_ref, params_ref, w_ref, o_ref):
    # Load the (TILE_B, D) activation tile once; reuse it for the residual add.
    x = x_ref[...]
    xf = x.astype(jnp.float32)

    # Packed affine params: row 0 = LayerNorm gamma, row 1 = LayerNorm beta,
    # row 2 = Linear bias. Resident in VMEM across all grid steps.
    p = params_ref[...]                  # (3, D) float32
    gamma = p[0:1, :]
    beta = p[1:2, :]
    bias = p[2:3, :]

    # ---- LayerNorm over the feature dim (f32 stats, biased variance, eps=1e-5) ----
    mean = jnp.mean(xf, axis=-1, keepdims=True)
    centered = xf - mean
    var = jnp.mean(centered * centered, axis=-1, keepdims=True)
    z = centered * jax.lax.rsqrt(var + LN_EPS)
    z = z * gamma + beta

    # ---- Linear (d -> d) on the MXU: feed in the weight dtype, accumulate in f32 ----
    z = jnp.dot(z.astype(w_ref.dtype), w_ref[...], preferred_element_type=jnp.float32)
    z = z + bias

    # ---- Activation (ReLU) ----
    z = jnp.maximum(z, 0.0)

    # ---- Dropout: identity in eval/inference mode ----
    # TODO(synk): training-mode dropout (pltpu.prng_seed + pltpu.prng_random_bits mask)
    # intentionally omitted; forward semantics here match module.eval().

    # ---- Residual ----
    o_ref[...] = (xf + z).astype(o_ref.dtype)


def _choose_tile_b(B: int) -> int:
    """Prefer MXU-filling batch tiles; degrade gracefully for small batches."""
    for t in (512, 256, 128):
        if B >= t and B % t == 0:
            return t
    for t in (512, 256, 128):
        if B >= t:
            return t
    return max(8, ((B + 7) // 8) * 8)  # round up to a sublane multiple


def resnet_block(x, gamma, beta, w, b, *, tile_b=None):
    """x: [B, D] (f32 or bf16); gamma/beta/b: [D]; w: [D, D] stored as (in, out)."""
    B, D = x.shape
    assert w.shape == (D, D)

    # Pack gamma / beta / bias into one (3, D) f32 array (single resident input).
    params = jnp.stack(
        [gamma.astype(jnp.float32), beta.astype(jnp.float32), b.astype(jnp.float32)],
        axis=0,
    )

    if tile_b is None:
        tile_b = _choose_tile_b(B)
    grid = (pl.cdiv(B, tile_b),)

    # Per-step VMEM estimate: double-buffered x & out tiles + resident weight/params.
    act_bytes = jnp.dtype(x.dtype).itemsize
    w_bytes = jnp.dtype(w.dtype).itemsize
    est = (2 * 2 * tile_b * D * act_bytes) + (2 * D * D * w_bytes) + (2 * 3 * D * 4)
    vmem_limit = None
    if est > (28 << 20):
        # Raise the scoped limit, but stay safely below v7x's 64 MiB physical VMEM.
        vmem_limit = min(48 << 20, est + (2 << 20))
    # TODO(synk): for very large D, also tile the (D, D) weight over a contraction
    # grid axis with an f32 VMEM accumulator (not needed at tabular-model sizes).

    return pl.pallas_call(
        resnet_block_kernel,
        out_shape=jax.ShapeDtypeStruct((B, D), x.dtype),
        grid=grid,
        in_specs=[
            pl.BlockSpec((tile_b, D), lambda i: (i, 0)),  # x: tiled over batch
            pl.BlockSpec((3, D), lambda i: (0, 0)),       # gamma/beta/bias: resident
            pl.BlockSpec((D, D), lambda i: (0, 0)),       # weight: resident
        ],
        out_specs=pl.BlockSpec((tile_b, D), lambda i: (i, 0)),
        compiler_params=pltpu.CompilerParams(
            dimension_semantics=("parallel",),
            vmem_limit_bytes=vmem_limit,
        ),
    )(x, params, w)


def resnet_block_ref(x, gamma, beta, w, b):
    """Pure-JAX reference (mirrors the PyTorch forward in eval mode)."""
    mean = jnp.mean(x, axis=-1, keepdims=True)
    var = jnp.mean((x - mean) ** 2, axis=-1, keepdims=True)
    z = (x - mean) / jnp.sqrt(var + LN_EPS)
    z = z * gamma + beta
    z = z @ w + b
    z = jnp.maximum(z, 0.0)
    return x + z


if __name__ == "__main__":
    B, D = 8, 128  # small shapes consistent with ResNetBlock(d=128)

    key = jax.random.PRNGKey(0)
    kx, kw, kb = jax.random.split(key, 3)

    x = jax.random.normal(kx, (B, D), dtype=jnp.float32)

    # Deterministic parameter init (shapes from the module __init__):
    #   LayerNorm(d): weight=ones(d), bias=zeros(d)
    #   Linear(d, d): weight ~ U(-1/sqrt(d), 1/sqrt(d)) [stored here as (d_in, d_out)]
    gamma = jnp.ones((D,), jnp.float32)
    beta = jnp.zeros((D,), jnp.float32)
    bound = 1.0 / math.sqrt(D)
    w = jax.random.uniform(kw, (D, D), jnp.float32, -bound, bound)
    b = jax.random.uniform(kb, (D,), jnp.float32, -bound, bound)

    ref = resnet_block_ref(x, gamma, beta, w, b)

    # f32 path: tight tolerance vs. reference.
    out = jax.block_until_ready(resnet_block(x, gamma, beta, w, b))
    assert out.shape == (B, D)
    assert jnp.allclose(out, ref, atol=1e-4, rtol=1e-4), "f32 mismatch vs reference"

    # bf16 I/O path (halves HBM traffic; LN stats + matmul accumulation stay f32).
    out_bf16 = jax.block_until_ready(
        resnet_block(x.astype(jnp.bfloat16), gamma, beta, w.astype(jnp.bfloat16), b)
    )
    assert out_bf16.dtype == jnp.bfloat16
    assert jnp.allclose(out_bf16.astype(jnp.float32), ref, atol=5e-2, rtol=5e-2), (
        "bf16 mismatch vs reference"
    )

    print("KERNEL_OK")
</pallas_src>

<mosaic_0001>
module attributes {stable_mosaic.version = 11 : i64} {
  func.func @resnet_block_kernel(%arg0: i32, %arg1: memref<8x128xf32, #tpu.memory_space<vmem>>, %arg2: memref<3x128xf32, #tpu.memory_space<vmem>>, %arg3: memref<128x128xf32, #tpu.memory_space<vmem>>, %arg4: memref<8x128xf32, #tpu.memory_space<vmem>>) attributes {dimension_semantics = [#tpu.dimension_semantics<parallel>], iteration_bounds = array<i64: 1>, scalar_prefetch = 0 : i64, scratch_operands = 0 : i64, tpu.core_type = #tpu.core_type<tc>, window_params = [{transform_indices = @transform_0, window_bounds = array<i64: 8, 128>}, {pipeline_mode = #tpu.pipeline_mode<synchronous>, transform_indices = @transform_1, window_bounds = array<i64: 3, 128>}, {pipeline_mode = #tpu.pipeline_mode<synchronous>, transform_indices = @transform_2, window_bounds = array<i64: 128, 128>}, {transform_indices = @transform_3, window_bounds = array<i64: 8, 128>}]} {
    %c0 = arith.constant 0 : index
    %c0_0 = arith.constant 0 : index
    %0 = vector.load %arg1[%c0, %c0_0] : memref<8x128xf32, #tpu.memory_space<vmem>>, vector<8x128xf32>
    %c0_1 = arith.constant 0 : index
    %c0_2 = arith.constant 0 : index
    %1 = vector.load %arg2[%c0_1, %c0_2] : memref<3x128xf32, #tpu.memory_space<vmem>>, vector<3x128xf32>
    %2 = vector.extract_strided_slice %1 {offsets = [0, 0], sizes = [1, 128], strides = [1, 1]} : vector<3x128xf32> to vector<1x128xf32>
    %3 = vector.extract_strided_slice %1 {offsets = [1, 0], sizes = [1, 128], strides = [1, 1]} : vector<3x128xf32> to vector<1x128xf32>
    %4 = vector.extract_strided_slice %1 {offsets = [2, 0], sizes = [1, 128], strides = [1, 1]} : vector<3x128xf32> to vector<1x128xf32>
    %cst = arith.constant dense<0.000000e+00> : vector<8xf32>
    %5 = vector.multi_reduction <add>, %0, %cst [1] : vector<8x128xf32> to vector<8xf32>
    %6 = vector.shape_cast %5 : vector<8xf32> to vector<8x1xf32>
    %cst_3 = arith.constant 1.280000e+02 : f32
    %7 = vector.broadcast %cst_3 : f32 to vector<8x1xf32>
    %8 = arith.divf %6, %7 : vector<8x1xf32>
    %9 = vector.broadcast %8 : vector<8x1xf32> to vector<8x128xf32>
    %10 = arith.subf %0, %9 : vector<8x128xf32>
    %11 = arith.mulf %10, %10 : vector<8x128xf32>
    %cst_4 = arith.constant dense<0.000000e+00> : vector<8xf32>
    %12 = vector.multi_reduction <add>, %11, %cst_4 [1] : vector<8x128xf32> to vector<8xf32>
    %13 = vector.shape_cast %12 : vector<8xf32> to vector<8x1xf32>
    %cst_5 = arith.constant 1.280000e+02 : f32
    %14 = vector.broadcast %cst_5 : f32 to vector<8x1xf32>
    %15 = arith.divf %13, %14 : vector<8x1xf32>
    %cst_6 = arith.constant 9.99999974E-6 : f32
    %16 = vector.broadcast %cst_6 : f32 to vector<8x1xf32>
    %17 = arith.addf %15, %16 : vector<8x1xf32>
    %18 = math.rsqrt %17 : vector<8x1xf32>
    %19 = vector.broadcast %18 : vector<8x1xf32> to vector<8x128xf32>
    %20 = arith.mulf %10, %19 : vector<8x128xf32>
    %21 = vector.broadcast %2 : vector<1x128xf32> to vector<8x128xf32>
    %22 = arith.mulf %20, %21 : vector<8x128xf32>
    %23 = vector.broadcast %3 : vector<1x128xf32> to vector<8x128xf32>
    %24 = arith.addf %22, %23 : vector<8x128xf32>
    %c0_7 = arith.constant 0 : index
    %c0_8 = arith.constant 0 : index
    %25 = vector.load %arg3[%c0_7, %c0_8] : memref<128x128xf32, #tpu.memory_space<vmem>>, vector<128x128xf32>
    %cst_9 = arith.constant dense<0.000000e+00> : vector<8x128xf32>
    %26 = tpu.matmul %24, %25, %cst_9 {dimension_numbers = #tpu.dot_dimension_numbers<[1], [0], [0], [1], [0, 0, 1, 1], [], []>} : vector<8x128xf32>, vector<128x128xf32>, vector<8x128xf32> -> vector<8x128xf32>
    %27 = vector.broadcast %4 : vector<1x128xf32> to vector<8x128xf32>
    %28 = arith.addf %26, %27 : vector<8x128xf32>
    %cst_10 = arith.constant 0.000000e+00 : f32
    %29 = vector.broadcast %cst_10 : f32 to vector<8x128xf32>
    %30 = arith.maximumf %28, %29 : vector<8x128xf32>
    %31 = arith.addf %0, %30 : vector<8x128xf32>
    %c0_11 = arith.constant 0 : index
    %c0_12 = arith.constant 0 : index
    %32 = vector.load %arg4[%c0_11, %c0_12] : memref<8x128xf32, #tpu.memory_space<vmem>>, vector<8x128xf32>
    tpu.vector_store %arg4[%c0_11, %c0_12], %31 {strides = array<i32>} : memref<8x128xf32, #tpu.memory_space<vmem>>, vector<8x128xf32>,
    return
  }
  func.func @transform_0(%arg0: i32) -> (i32, i32) {
    %c0_i32 = arith.constant 0 : i32
    %c0_i32_0 = arith.constant 0 : i32
    return %arg0, %c0_i32 : i32, i32
  }
  func.func @transform_1(%arg0: i32) -> (i32, i32) {
    %c0_i32 = arith.constant 0 : i32
    %c0_i32_0 = arith.constant 0 : i32
    %c0_i32_1 = arith.constant 0 : i32
    return %c0_i32, %c0_i32_0 : i32, i32
  }
  func.func @transform_2(%arg0: i32) -> (i32, i32) {
    %c0_i32 = arith.constant 0 : i32
    %c0_i32_0 = arith.constant 0 : i32
    %c0_i32_1 = arith.constant 0 : i32
    return %c0_i32, %c0_i32_0 : i32, i32
  }
  func.func @transform_3(%arg0: i32) -> (i32, i32) {
    %c0_i32 = arith.constant 0 : i32
    %c0_i32_0 = arith.constant 0 : i32
    return %arg0, %c0_i32 : i32, i32
  }
}

</mosaic_0001>

<llo_original>
// kernel: tpu_custom_call.1
$region0: #{tpu_custom_call.1}
  #allocation0 [shape = 'u32[]', space=smem, size = 0x4, offset = 0x4, fixed_abs, tag = 'smem constant byte address 0x4 - core index']
  #allocation1 [shape = 'u32[72,128]{1,0:T(1,128)}', space=vmem, size = 0x9000, scoped, tag = 'internal scratch']
  %s0 = inlined_call_operand.hbm [shape: f32[8,128], index: 0, kind: input, shape index: {}]
  %s1 = inlined_call_operand.hbm [shape: f32[3,128], index: 1, kind: input, shape index: {}]
  %s2 = inlined_call_operand.hbm [shape: f32[128,128], index: 2, kind: input, shape index: {}]
  %s3 = inlined_call_operand.hbm [shape: f32[8,128], index: 3, kind: output, shape index: {}]
  %s4 = sld [smem:[#allocation0]]
  $region34: #{tpu_custom_call.1} parent=0
    _
  %s6 = ssub.s32 1, %s4
  %s7 = scalar_select 0, %s6, %s4
  $region1: #{tpu_custom_call.1} parent=0
    #allocation2 [shape = 'u8[4096]{0}', space=vmem, size = 0x1000, scoped, tag = 'input window, operand 0, single buffered']
    #allocation3 [shape = 's32[1]{0}', space=sflag, size = 0x4, scoped, tag = 'scoped memory for tpu_custom_call.1']
    #allocation4 [shape = 's32[1]{0}', space=sflag, size = 0x4, scoped, tag = 'scoped memory for tpu_custom_call.1']
    #allocation5 [shape = 'u8[2048]{0}', space=vmem, size = 0x800, scoped, tag = 'input window, operand 1, single buffered']
    #allocation6 [shape = 's32[1]{0}', space=sflag, size = 0x4, scoped, tag = 'scoped memory for tpu_custom_call.1']
    #allocation7 [shape = 'u8[65536]{0}', space=vmem, size = 0x10000, scoped, tag = 'input window, operand 2, single buffered']
    #allocation8 [shape = 'u8[4096]{0}', space=vmem, size = 0x1000, scoped, tag = 'output window, operand 0, single buffered']
    %8 = vsyncpa [#allocation3], 0
    %9 = vsyncpa [#allocation6], 0
    %10 = vsyncpa [#allocation4], 0
    // Predicated region
    $region2: #{tpu_custom_call.1} parent=1 // pred_check
      _
    $region3: #{tpu_custom_call.1} parent=1 // pred_check_branch
      %12 = sbr.rel (0) target = $region5
    $region4: #{tpu_custom_call.1} parent=1 // pred_region
      %14 = vsyncadd [#allocation3], 0
      %s16 = sshll.u32 %s0, 4
      %s17 = int_to_ptr.hbm [resolvable:$true] %s16
      %s18 = sshll.u32 [#allocation2], 4
      %s19 = int_to_ptr.vmem [resolvable:$true] %s18
      %21 = dma.hbm_to_vmem [thread:$0]  %s17, 128, %s19, [#allocation3]
    $region5: #{tpu_custom_call.1} parent=1 // pred_fallthru
      _
    // Predicated region
    $region6: #{tpu_custom_call.1} parent=1 // pred_check
      _
    $region7: #{tpu_custom_call.1} parent=1 // pred_check_branch
      %23 = sbr.rel (0) target = $region9
    $region8: #{tpu_custom_call.1} parent=1 // pred_region
      %25 = vsyncadd [#allocation6], 0
      %s27 = sshll.u32 %s1, 4
      %s28 = int_to_ptr.hbm [resolvable:$true] %s27
      %s29 = sshll.u32 [#allocation5], 4
      %s30 = int_to_ptr.vmem [resolvable:$true] %s29
      %32 = dma.hbm_to_vmem [thread:$0]  %s28, 64, %s30, [#allocation6]
    $region9: #{tpu_custom_call.1} parent=1 // pred_fallthru
      _
    // Predicated region
    $region10: #{tpu_custom_call.1} parent=1 // pred_check
      _
    $region11: #{tpu_custom_call.1} parent=1 // pred_check_branch
      %34 = sbr.rel (0) target = $region13
    $region12: #{tpu_custom_call.1} parent=1 // pred_region
      %36 = vsyncadd [#allocation6], 0
      %s37 = sshll.u32 %s2, 4
      %s38 = int_to_ptr.hbm [resolvable:$true] %s37
      %s39 = sshll.u32 [#allocation7], 4
      %s40 = int_to_ptr.vmem [resolvable:$true] %s39
      %45 = dma.hbm_to_vmem [thread:$0]  %s38, 2048, %s40, [#allocation6], 128, 128, 8
    $region13: #{tpu_custom_call.1} parent=1 // pred_fallthru
      _
    // Predicated region
    $region14: #{tpu_custom_call.1} parent=1 // pred_check
      _
    $region15: #{tpu_custom_call.1} parent=1 // pred_check_branch
      %47 = sbr.rel (0) target = $region17
    $region16: #{tpu_custom_call.1} parent=1 // pred_region
      %49 = dma.done [#allocation3], 128
    $region17: #{tpu_custom_call.1} parent=1 // pred_fallthru
      _
    // Predicated region
    $region18: #{tpu_custom_call.1} parent=1 // pred_check
      _
    $region19: #{tpu_custom_call.1} parent=1 // pred_check_branch
      %51 = sbr.rel (0) target = $region21
    $region20: #{tpu_custom_call.1} parent=1 // pred_region
      %53 = dma.done [#allocation6], 64
    $region21: #{tpu_custom_call.1} parent=1 // pred_fallthru
      _
    // Predicated region
    $region22: #{tpu_custom_call.1} parent=1 // pred_check
      _
    $region23: #{tpu_custom_call.1} parent=1 // pred_check_branch
      %55 = sbr.rel (0) target = $region25
    $region24: #{tpu_custom_call.1} parent=1 // pred_region
      %57 = dma.done [#allocation6], 2048
    $region25: #{tpu_custom_call.1} parent=1 // pred_fallthru
      _
    %v58 = vld [vmem:[#allocation2] sm:$0xff]
    %v59 = vld [vmem:[#allocation5] sm:$0x7]
    %60 = vadd.xlane.f32.xlu0 %v58
    %v61 = vpop.xlane.xlu0 %60
    %v62 = vrcp.pop 128.0
    %v63 = vmul.f32 128.0, %v62
    %v64 = vsub.f32 1.0, %v63
    %v65 = vmul.f32 %v62, %v64
    %v66 = vadd.f32 %v62, %v65
    %vm67 = vweird.f32 %v62
    %v68 = vsel %vm67, %v62, %v66
    %v69 = vmul.f32 %v61, %v68
    %v70 = vsub.f32 %v58, %v69
    %v71 = vmul.f32 %v70, %v70
    %72 = vadd.xlane.f32.xlu0 %v71
    %v73 = vpop.xlane.xlu0 %72
    %v74 = vmul.f32 %v73, %v68
    %v75 = vadd.f32 %v74, 1e-05
    %v76 = vrsqrt.pop %v75
    %v77 = vmul.f32 %v76, %v75
    %v78 = vmul.f32 %v77, %v76
    %v79 = vmul.f32 0.5, %v78
    %v80 = vsub.f32 1.5, %v79
    %v81 = vmul.f32 %v76, %v80
    %vm82 = vweird.f32 %v75
    %vm83 = vweird.f32 %v76
    %vm84 = vmor %vm82, %vm83
    %v85 = vsel %vm84, %v76, %v81
    %v86 = vmul.f32 %v70, %v85
    %v87 = vperm.slane %v59, 0
    %v88 = vmul.f32 %v86, %v87
    %v89 = vperm.slane %v59, 1
    %v90 = vadd.f32 %v88, %v89
    %v91 = vld [vmem:[#allocation7] sm:$0xff]
    %v92 = vld [vmem:[#allocation7 + $0x8] sm:$0xff]
    %v93 = vld [vmem:[#allocation7 + $0x10] sm:$0xff]
    %v94 = vld [vmem:[#allocation7 + $0x18] sm:$0xff]
    %v95 = vld [vmem:[#allocation7 + $0x20] sm:$0xff]
    %v96 = vld [vmem:[#allocation7 + $0x28] sm:$0xff]
    %v97 = vld [vmem:[#allocation7 + $0x30] sm:$0xff]
    %v98 = vld [vmem:[#allocation7 + $0x38] sm:$0xff]
    %v99 = vld [vmem:[#allocation7 + $0x40] sm:$0xff]
    %v100 = vld [vmem:[#allocation7 + $0x48] sm:$0xff]
    %v101 = vld [vmem:[#allocation7 + $0x50] sm:$0xff]
    %v102 = vld [vmem:[#allocation7 + $0x58] sm:$0xff]
    %v103 = vld [vmem:[#allocation7 + $0x60] sm:$0xff]
    %v104 = vld [vmem:[#allocation7 + $0x68] sm:$0xff]
    %v105 = vld [vmem:[#allocation7 + $0x70] sm:$0xff]
    %v106 = vld [vmem:[#allocation7 + $0x78] sm:$0xff]
    %v107 = vperm.slane %v59, 2
    %108 = vmatpush.msra.mxu0 %v106
    %109 = vmatpush.msra.mxu0 %v105
    %110 = vmatpush.msra.mxu0 %v104
    %111 = vmatpush.msra.mxu0 %v103
    %112 = vmatpush.msra.mxu0 %v102
    %113 = vmatpush.msra.mxu0 %v101
    %114 = vmatpush.msra.mxu0 %v100
    %115 = vmatpush.msra.mxu0 %v99
    %116 = vmatpush.msra.mxu0 %v98
    %117 = vmatpush.msra.mxu0 %v97
    %118 = vmatpush.msra.mxu0 %v96
    %119 = vmatpush.msra.mxu0 %v95
    %120 = vmatpush.msra.mxu0 %v94
    %121 = vmatpush.msra.mxu0 %v93
    %122 = vmatpush.msra.mxu0 %v92
    %123 = vmatpush.msra.mxu0 %v91
    %124 = vmatmul.f32.gmra.mxu0 %v90
    %v125 = vpop.f32.mrf.mxu0
    %v126 = vadd.f32 %v107, %v125
    %127 = vdwg.mxu0
    %v128 = vmax.f32 %v126, 0.0
    %v129 = vadd.f32 %v58, %v128
    %130 = vst [vmem:[#allocation8] sm:$0xff] %v129
    // Predicated region
    $region26: #{tpu_custom_call.1} parent=1 // pred_check
      _
    $region27: #{tpu_custom_call.1} parent=1 // pred_check_branch
      %132 = sbr.rel (0) target = $region29
    $region28: #{tpu_custom_call.1} parent=1 // pred_region
      %134 = vsyncadd [#allocation4], 0
      %s136 = sshll.u32 [#allocation8], 4
      %s137 = int_to_ptr.vmem [resolvable:$true] %s136
      %s138 = sshll.u32 %s3, 4
      %s139 = int_to_ptr.hbm [resolvable:$true] %s138
      %141 = dma.vmem_to_hbm [thread:$0]  %s137, 128, %s139, [#allocation4]
    $region29: #{tpu_custom_call.1} parent=1 // pred_fallthru
      _
    // Predicated region
    $region30: #{tpu_custom_call.1} parent=1 // pred_check
      _
    $region31: #{tpu_custom_call.1} parent=1 // pred_check_branch
      %143 = sbr.rel (0) target = $region33
    $region32: #{tpu_custom_call.1} parent=1 // pred_region
      %145 = dma.done [#allocation4], 128
    $region33: #{tpu_custom_call.1} parent=1 // pred_fallthru
      _
    %146 = vsyncpa [#allocation3], 1
    %147 = vsyncpa [#allocation6], 1
    %148 = vsyncpa [#allocation4], 1

</llo_original>
